<compile_context>
chip_gen: v5e
topology: v5e:2x2
jax: 0.10.0
libtpu: 0.0.40
codegen_flags: <defaults>
</compile_context>

<pallas_src>
import jax
import jax.numpy as jnp
from jax import lax
from jax.experimental import pallas as pl
from jax.experimental.pallas import tpu as pltpu


def additive_attention_kernel(vl_ref,                       # (TB, 1, 1) int32 valid_lens tile
                              q_ref, k_ref, v_ref,          # (TB,TQ,Dq) (TB,TK,Dk) (TB,TK,Dvp)
                              wq_ref, wk_ref, wv_ref,       # (Dq,Hp) (Dk,Hp) (1,Hp)
                              out_ref,                      # (TB,TQ,Dvp)
                              qh_sc, m_sc, l_sc, acc_sc):   # VMEM scratch
    k_idx = pl.program_id(2)
    nk = pl.num_programs(2)

    TB, TQ, Dq = q_ref.shape
    _, TK, Dk = k_ref.shape
    Hp = wq_ref.shape[1]
    cdt = qh_sc.dtype                       # compute dtype for the elementwise chain

    @pl.when(k_idx == 0)
    def _():
        # Query projection once per (batch, Q-tile) program; batch+Q folded into the
        # MXU M dim. Accumulate f32 on the MXU, store the compute-dtype copy.
        q2 = q_ref[...].reshape(TB * TQ, Dq)
        qh = jnp.dot(q2, wq_ref[...], preferred_element_type=jnp.float32)
        qh_sc[...] = qh.reshape(TB, TQ, Hp).astype(cdt)
        # Online-softmax state init.
        m_sc[...] = jnp.full_like(m_sc, -jnp.inf)
        l_sc[...] = jnp.zeros_like(l_sc)
        acc_sc[...] = jnp.zeros_like(acc_sc)

    # Key projection for this K-tile, batch folded into the MXU M dim.
    kh = jnp.dot(k_ref[...].reshape(TB * TK, Dk), wk_ref[...],
                 preferred_element_type=jnp.float32).reshape(TB, TK, Hp).astype(cdt)

    # features = tanh(W_q(q)[:, :, None, :] + W_k(k)[:, None, :, :]) -> (TB,TQ,TK,Hp)
    # Dominant elementwise slab; runs in compute_dtype (bf16 by default).
    feat = jnp.tanh(qh_sc[...][:, :, None, :] + kh[:, None, :, :])

    # scores = <features, w_v> over the lane (Hp) axis: VPU mul + XLU lane reduce,
    # accumulated in f32.
    # TODO(synk): if the bundle shows the XLU lane-reduce binding before the EUP,
    # route this reduction through the (idle) MXU via an (Hp,128) matrix with w_v in
    # column 0 instead.
    wv = wv_ref[...][None, None]                                    # (1,1,1,Hp)
    scores = jnp.sum((feat * wv).astype(jnp.float32), axis=-1)      # (TB,TQ,TK) f32

    # masked_softmax: key index >= valid_len[b] -> -1e6 (matches d2l sequence_mask).
    # Padded K rows (col >= K >= valid_len) are masked out by the same comparison.
    col = k_idx * TK + lax.broadcasted_iota(jnp.int32, (TB, TQ, TK), 2)
    vl = vl_ref[...]                                                # (TB,1,1) int32
    scores = jnp.where(col < vl, scores, jnp.float32(-1.0e6))

    # Flash-style online softmax accumulation across K tiles (f32 state).
    m_prev = m_sc[...]
    m_new = jnp.maximum(m_prev, jnp.max(scores, axis=-1, keepdims=True))
    alpha = jnp.exp(m_prev - m_new)
    p = jnp.exp(scores - m_new)
    l_sc[...] = alpha * l_sc[...] + jnp.sum(p, axis=-1, keepdims=True)
    acc_sc[...] = alpha * acc_sc[...] + jnp.einsum(
        'bqk,bkd->bqd', p.astype(v_ref.dtype), v_ref[...],
        preferred_element_type=jnp.float32)
    m_sc[...] = m_new

    @pl.when(k_idx == nk - 1)
    def _():
        # TODO(synk): dropout omitted (module run in eval mode -> identity).
        inv_l = pl.reciprocal(l_sc[...], approx=True)
        out_ref[...] = (acc_sc[...] * inv_l).astype(out_ref.dtype)


def additive_attention(queries, keys, values, valid_lens, w_q, w_k, w_v, *,
                       block_b=None, block_q=64, block_k=256,
                       compute_dtype=jnp.bfloat16,
                       vmem_limit_bytes=48 * 1024 * 1024):
    """Additive attention forward. valid_lens: 1-D per-batch int vector.

    block_k: 256 is a good default for v6e/v7x; 128 on v5e. block_q bounds the
    per-step feat slab (TB*block_q*block_k*Hp*2B ~ 4 MiB/TB at defaults).
    """
    B, Q, Dq = queries.shape
    _, K, Dk = keys.shape
    Dv = values.shape[-1]
    H = w_q.shape[-1]
    assert valid_lens.ndim == 1  # TODO(synk): 2-D per-query valid_lens branch unsupported.

    LANE, SUB = 128, 8
    rup = lambda x, m: ((x + m - 1) // m) * m

    Hp = rup(H, LANE)
    Dvp = rup(Dv, LANE)
    TQ = min(rup(block_q, SUB), rup(Q, SUB))
    TK = min(rup(block_k, SUB), rup(K, SUB))
    Qp = rup(Q, TQ)
    Kp = rup(K, TK)

    # Batch tile: keep the leading grid axis non-degenerate (>=2 programs) so v7x's
    # two TensorCores can split the work; harmless on v5e/v6e.
    if block_b is None:
        block_b = B // 2 if (B > 1 and B % 2 == 0) else (1 if B > 1 else B)
    TB = block_b
    assert B % TB == 0

    # Params: pad hidden dim to a full lane (exact: tanh(0+0) * 0-padded w_v == 0)
    # and cast to the MXU/VPU compute dtype. Tiny arrays -> negligible cost.
    w_q_p = jnp.pad(w_q, ((0, 0), (0, Hp - H))).astype(compute_dtype)
    w_k_p = jnp.pad(w_k, ((0, 0), (0, Hp - H))).astype(compute_dtype)
    w_v_p = jnp.pad(w_v.reshape(1, H), ((0, 0), (0, Hp - H))).astype(compute_dtype)

    # Large operands: cast to compute dtype (halves streamed DMA bytes when f32 in,
    # no-op when already matching) and pad only when the tiling requires it.
    q_in = queries.astype(compute_dtype)
    k_in = keys.astype(compute_dtype)
    v_in = values.astype(compute_dtype)
    if Qp != Q:
        q_in = jnp.pad(q_in, ((0, 0), (0, Qp - Q), (0, 0)))
    if Kp != K:
        k_in = jnp.pad(k_in, ((0, 0), (0, Kp - K), (0, 0)))
    if Kp != K or Dvp != Dv:
        v_in = jnp.pad(v_in, ((0, 0), (0, Kp - K), (0, Dvp - Dv)))

    vl = valid_lens.astype(jnp.int32).reshape(B, 1, 1)

    grid = (B // TB, Qp // TQ, Kp // TK)

    grid_spec = pltpu.PrefetchScalarGridSpec(
        num_scalar_prefetch=0,
        grid=grid,
        in_specs=[
            pl.BlockSpec((TB, 1, 1),    lambda b, q, k: (b, 0, 0)),   # valid_lens
            pl.BlockSpec((TB, TQ, Dq),  lambda b, q, k: (b, q, 0)),   # queries (Q-tiled)
            pl.BlockSpec((TB, TK, Dk),  lambda b, q, k: (b, k, 0)),   # keys (K-tiled)
            pl.BlockSpec((TB, TK, Dvp), lambda b, q, k: (b, k, 0)),   # values (K-tiled, padded)
            pl.BlockSpec((Dq, Hp),      lambda b, q, k: (0, 0)),      # W_q (padded)
            pl.BlockSpec((Dk, Hp),      lambda b, q, k: (0, 0)),      # W_k (padded)
            pl.BlockSpec((1, Hp),       lambda b, q, k: (0, 0)),      # w_v row (padded)
        ],
        out_specs=pl.BlockSpec((TB, TQ, Dvp), lambda b, q, k: (b, q, 0)),
        scratch_shapes=[
            pltpu.VMEM((TB, TQ, Hp), compute_dtype),   # cached query projection
            pltpu.VMEM((TB, TQ, 1), jnp.float32),      # running max
            pltpu.VMEM((TB, TQ, 1), jnp.float32),      # running denominator
            pltpu.VMEM((TB, TQ, Dvp), jnp.float32),    # output accumulator
        ],
    )

    out_p = pl.pallas_call(
        additive_attention_kernel,
        out_shape=jax.ShapeDtypeStruct((B, Qp, Dvp), jnp.float32),
        grid_spec=grid_spec,
        compiler_params=pltpu.CompilerParams(
            dimension_semantics=("parallel", "parallel", "arbitrary"),
            vmem_limit_bytes=vmem_limit_bytes),
    )(vl, q_in, k_in, v_in, w_q_p, w_k_p, w_v_p)

    return out_p[:, :Q, :Dv]


def additive_attention_ref(queries, keys, values, valid_lens, w_q, w_k, w_v):
    qh = queries @ w_q
    kh = keys @ w_k
    feat = jnp.tanh(qh[:, :, None, :] + kh[:, None, :, :])
    scores = jnp.squeeze(feat @ w_v, -1)
    mask = jnp.arange(keys.shape[1])[None, None, :] < valid_lens[:, None, None]
    scores = jnp.where(mask, scores, -1.0e6)
    attn = jax.nn.softmax(scores, axis=-1)
    return attn @ values


if __name__ == "__main__":
    B, Q, K = 2, 8, 16          # batch, num queries, num key-value pairs
    Dq, Dk, Dv, H = 32, 32, 32, 32

    key = jax.random.PRNGKey(0)
    kq, kk, kv, kwq, kwk, kwv = jax.random.split(key, 6)

    queries = jax.random.normal(kq, (B, Q, Dq), jnp.float32)
    keys    = jax.random.normal(kk, (B, K, Dk), jnp.float32)
    values  = jax.random.normal(kv, (B, K, Dv), jnp.float32)
    valid_lens = jnp.array([5, 12], dtype=jnp.int32)

    # Deterministic nn.Linear-style init: U(-1/sqrt(fan_in), 1/sqrt(fan_in)).
    def lin_init(k, fan_in, fan_out):
        b = 1.0 / (fan_in ** 0.5)
        return jax.random.uniform(k, (fan_in, fan_out), jnp.float32, -b, b)

    w_q = lin_init(kwq, Dq, H)
    w_k = lin_init(kwk, Dk, H)
    w_v = lin_init(kwv, H, 1)

    out = additive_attention(queries, keys, values, valid_lens, w_q, w_k, w_v)
    out = jax.block_until_ready(out)

    ref = additive_attention_ref(queries, keys, values, valid_lens, w_q, w_k, w_v)
    assert out.shape == (B, Q, Dv)
    # Tolerance covers the bf16 feat chain / bf16 MXU inputs + approx reciprocal.
    # (compute_dtype=jnp.float32 holds 2e-3 against the same reference.)
    assert jnp.allclose(out, ref, atol=5e-2, rtol=5e-2), float(jnp.abs(out - ref).max())

    print("KERNEL_OK")
</pallas_src>

<mosaic_0001>
module attributes {stable_mosaic.version = 11 : i64} {
  func.func @additive_attention_kernel(%arg0: i32, %arg1: i32, %arg2: i32, %arg3: memref<1x1x1xi32, #tpu.memory_space<vmem>>, %arg4: memref<1x8x32xbf16, #tpu.memory_space<vmem>>, %arg5: memref<1x16x32xbf16, #tpu.memory_space<vmem>>, %arg6: memref<1x16x128xbf16, #tpu.memory_space<vmem>>, %arg7: memref<32x128xbf16, #tpu.memory_space<vmem>>, %arg8: memref<32x128xbf16, #tpu.memory_space<vmem>>, %arg9: memref<1x128xbf16, #tpu.memory_space<vmem>>, %arg10: memref<1x8x128xf32, #tpu.memory_space<vmem>>, %arg11: memref<1x8x128xbf16, #tpu.memory_space<vmem>>, %arg12: memref<1x8x1xf32, #tpu.memory_space<vmem>>, %arg13: memref<1x8x1xf32, #tpu.memory_space<vmem>>, %arg14: memref<1x8x128xf32, #tpu.memory_space<vmem>>) attributes {dimension_semantics = [#tpu.dimension_semantics<parallel>, #tpu.dimension_semantics<parallel>, #tpu.dimension_semantics<arbitrary>], iteration_bounds = array<i64: 2, 1, 1>, scalar_prefetch = 0 : i64, scratch_operands = 4 : i64, tpu.core_type = #tpu.core_type<tc>, window_params = [{transform_indices = @transform_0, window_bounds = array<i64: 1, 1, 1>}, {transform_indices = @transform_1, window_bounds = array<i64: 1, 8, 32>}, {transform_indices = @transform_2, window_bounds = array<i64: 1, 16, 32>}, {transform_indices = @transform_3, window_bounds = array<i64: 1, 16, 128>}, {pipeline_mode = #tpu.pipeline_mode<synchronous>, transform_indices = @transform_4, window_bounds = array<i64: 32, 128>}, {pipeline_mode = #tpu.pipeline_mode<synchronous>, transform_indices = @transform_5, window_bounds = array<i64: 32, 128>}, {pipeline_mode = #tpu.pipeline_mode<synchronous>, transform_indices = @transform_6, window_bounds = array<i64: 1, 128>}, {transform_indices = @transform_7, window_bounds = array<i64: 1, 8, 128>}]} {
    %c0_i32 = arith.constant 0 : i32
    %0 = arith.cmpi eq, %arg2, %c0_i32 : i32
    %1 = arith.extui %0 : i1 to i32
    %c0_i32_0 = arith.constant 0 : i32
    %2 = arith.cmpi ne, %1, %c0_i32_0 : i32
    scf.if %2 {
      %c0_41 = arith.constant 0 : index
      %c0_42 = arith.constant 0 : index
      %c0_43 = arith.constant 0 : index
      %58 = vector.load %arg4[%c0_41, %c0_42, %c0_43] : memref<1x8x32xbf16, #tpu.memory_space<vmem>>, vector<1x8x32xbf16>
      %59 = vector.shape_cast %58 : vector<1x8x32xbf16> to vector<8x32xbf16>
      %c0_44 = arith.constant 0 : index
      %c0_45 = arith.constant 0 : index
      %60 = vector.load %arg7[%c0_44, %c0_45] : memref<32x128xbf16, #tpu.memory_space<vmem>>, vector<32x128xbf16>
      %cst_46 = arith.constant dense<0.000000e+00> : vector<8x128xf32>
      %61 = tpu.matmul %59, %60, %cst_46 {dimension_numbers = #tpu.dot_dimension_numbers<[1], [0], [0], [1], [0, 0, 1, 1], [], []>} : vector<8x32xbf16>, vector<32x128xbf16>, vector<8x128xf32> -> vector<8x128xf32>
      %62 = vector.shape_cast %61 : vector<8x128xf32> to vector<1x8x128xf32>
      %63 = arith.truncf %62 : vector<1x8x128xf32> to vector<1x8x128xbf16>
      %c0_47 = arith.constant 0 : index
      %c0_48 = arith.constant 0 : index
      %c0_49 = arith.constant 0 : index
      %64 = vector.load %arg11[%c0_47, %c0_48, %c0_49] : memref<1x8x128xbf16, #tpu.memory_space<vmem>>, vector<1x8x128xbf16>
      tpu.vector_store %arg11[%c0_47, %c0_48, %c0_49], %63 {strides = array<i32>} : memref<1x8x128xbf16, #tpu.memory_space<vmem>>, vector<1x8x128xbf16>,
      %cst_50 = arith.constant 0xFF800000 : f32
      %65 = vector.broadcast %cst_50 : f32 to vector<1x8x1xf32>
      %c0_51 = arith.constant 0 : index
      %c0_52 = arith.constant 0 : index
      %c0_53 = arith.constant 0 : index
      %66 = vector.load %arg12[%c0_51, %c0_52, %c0_53] : memref<1x8x1xf32, #tpu.memory_space<vmem>>, vector<1x8x1xf32>
      tpu.vector_store %arg12[%c0_51, %c0_52, %c0_53], %65 {strides = array<i32>} : memref<1x8x1xf32, #tpu.memory_space<vmem>>, vector<1x8x1xf32>,
      %cst_54 = arith.constant 0.000000e+00 : f32
      %67 = vector.broadcast %cst_54 : f32 to vector<1x8x1xf32>
      %c0_55 = arith.constant 0 : index
      %c0_56 = arith.constant 0 : index
      %c0_57 = arith.constant 0 : index
      %68 = vector.load %arg13[%c0_55, %c0_56, %c0_57] : memref<1x8x1xf32, #tpu.memory_space<vmem>>, vector<1x8x1xf32>
      tpu.vector_store %arg13[%c0_55, %c0_56, %c0_57], %67 {strides = array<i32>} : memref<1x8x1xf32, #tpu.memory_space<vmem>>, vector<1x8x1xf32>,
      %cst_58 = arith.constant 0.000000e+00 : f32
      %69 = vector.broadcast %cst_58 : f32 to vector<1x8x128xf32>
      %c0_59 = arith.constant 0 : index
      %c0_60 = arith.constant 0 : index
      %c0_61 = arith.constant 0 : index
      %70 = vector.load %arg14[%c0_59, %c0_60, %c0_61] : memref<1x8x128xf32, #tpu.memory_space<vmem>>, vector<1x8x128xf32>
      tpu.vector_store %arg14[%c0_59, %c0_60, %c0_61], %69 {strides = array<i32>} : memref<1x8x128xf32, #tpu.memory_space<vmem>>, vector<1x8x128xf32>,
    } else {
    }
    %c0 = arith.constant 0 : index
    %c0_1 = arith.constant 0 : index
    %c0_2 = arith.constant 0 : index
    %3 = vector.load %arg5[%c0, %c0_1, %c0_2] : memref<1x16x32xbf16, #tpu.memory_space<vmem>>, vector<1x16x32xbf16>
    %4 = vector.shape_cast %3 : vector<1x16x32xbf16> to vector<16x32xbf16>
    %c0_3 = arith.constant 0 : index
    %c0_4 = arith.constant 0 : index
    %5 = vector.load %arg8[%c0_3, %c0_4] : memref<32x128xbf16, #tpu.memory_space<vmem>>, vector<32x128xbf16>
    %cst = arith.constant dense<0.000000e+00> : vector<16x128xf32>
    %6 = tpu.matmul %4, %5, %cst {dimension_numbers = #tpu.dot_dimension_numbers<[1], [0], [0], [1], [0, 0, 1, 1], [], []>} : vector<16x32xbf16>, vector<32x128xbf16>, vector<16x128xf32> -> vector<16x128xf32>
    %7 = vector.shape_cast %6 : vector<16x128xf32> to vector<1x16x128xf32>
    %8 = arith.truncf %7 : vector<1x16x128xf32> to vector<1x16x128xbf16>
    %c0_5 = arith.constant 0 : index
    %c0_6 = arith.constant 0 : index
    %c0_7 = arith.constant 0 : index
    %9 = vector.load %arg11[%c0_5, %c0_6, %c0_7] : memref<1x8x128xbf16, #tpu.memory_space<vmem>>, vector<1x8x128xbf16>
    %10 = vector.shape_cast %9 : vector<1x8x128xbf16> to vector<1x8x1x128xbf16>
    %11 = vector.shape_cast %8 : vector<1x16x128xbf16> to vector<1x1x16x128xbf16>
    %12 = vector.broadcast %10 : vector<1x8x1x128xbf16> to vector<1x8x16x128xbf16>
    %13 = vector.broadcast %11 : vector<1x1x16x128xbf16> to vector<1x8x16x128xbf16>
    %14 = arith.addf %12, %13 : vector<1x8x16x128xbf16>
    %15 = math.tanh %14 : vector<1x8x16x128xbf16>
    %c0_8 = arith.constant 0 : index
    %c0_9 = arith.constant 0 : index
    %16 = vector.load %arg9[%c0_8, %c0_9] : memref<1x128xbf16, #tpu.memory_space<vmem>>, vector<1x128xbf16>
    %17 = vector.shape_cast %16 : vector<1x128xbf16> to vector<1x1x1x128xbf16>
    %18 = vector.broadcast %17 : vector<1x1x1x128xbf16> to vector<1x8x16x128xbf16>
    %19 = arith.mulf %15, %18 : vector<1x8x16x128xbf16>
    %20 = arith.extf %19 : vector<1x8x16x128xbf16> to vector<1x8x16x128xf32>
    %cst_10 = arith.constant dense<0.000000e+00> : vector<1x8x16xf32>
    %21 = vector.multi_reduction <add>, %20, %cst_10 [3] : vector<1x8x16x128xf32> to vector<1x8x16xf32>
    %c16_i32 = arith.constant 16 : i32
    %22 = arith.muli %arg2, %c16_i32 : i32
    %23 = tpu.iota {dimensions = array<i32: 2>} : vector<1x8x16xi32>
    %24 = vector.broadcast %22 : i32 to vector<1x8x16xi32>
    %25 = arith.addi %24, %23 : vector<1x8x16xi32>
    %c0_11 = arith.constant 0 : index
    %c0_12 = arith.constant 0 : index
    %c0_13 = arith.constant 0 : index
    %26 = vector.load %arg3[%c0_11, %c0_12, %c0_13] : memref<1x1x1xi32, #tpu.memory_space<vmem>>, vector<1x1x1xi32>
    %27 = vector.broadcast %26 : vector<1x1x1xi32> to vector<1x8x16xi32>
    %28 = arith.cmpi slt, %25, %27 : vector<1x8x16xi32>
    %cst_14 = arith.constant -1.000000e+06 : f32
    %29 = vector.broadcast %cst_14 : f32 to vector<1x8x16xf32>
    %30 = arith.select %28, %21, %29 : vector<1x8x16xi1>, vector<1x8x16xf32>
    %c0_15 = arith.constant 0 : index
    %c0_16 = arith.constant 0 : index
    %c0_17 = arith.constant 0 : index
    %31 = vector.load %arg12[%c0_15, %c0_16, %c0_17] : memref<1x8x1xf32, #tpu.memory_space<vmem>>, vector<1x8x1xf32>
    %cst_18 = arith.constant dense<0xFF800000> : vector<1x8xf32>
    %32 = vector.multi_reduction <maximumf>, %30, %cst_18 [2] : vector<1x8x16xf32> to vector<1x8xf32>
    %33 = vector.shape_cast %32 : vector<1x8xf32> to vector<1x8x1xf32>
    %34 = arith.maximumf %31, %33 : vector<1x8x1xf32>
    %35 = arith.subf %31, %34 : vector<1x8x1xf32>
    %36 = math.exp %35 : vector<1x8x1xf32>
    %37 = vector.broadcast %34 : vector<1x8x1xf32> to vector<1x8x16xf32>
    %38 = arith.subf %30, %37 : vector<1x8x16xf32>
    %39 = math.exp %38 : vector<1x8x16xf32>
    %c0_19 = arith.constant 0 : index
    %c0_20 = arith.constant 0 : index
    %c0_21 = arith.constant 0 : index
    %40 = vector.load %arg13[%c0_19, %c0_20, %c0_21] : memref<1x8x1xf32, #tpu.memory_space<vmem>>, vector<1x8x1xf32>
    %41 = arith.mulf %36, %40 : vector<1x8x1xf32>
    %cst_22 = arith.constant dense<0.000000e+00> : vector<1x8xf32>
    %42 = vector.multi_reduction <add>, %39, %cst_22 [2] : vector<1x8x16xf32> to vector<1x8xf32>
    %43 = vector.shape_cast %42 : vector<1x8xf32> to vector<1x8x1xf32>
    %44 = arith.addf %41, %43 : vector<1x8x1xf32>
    %c0_23 = arith.constant 0 : index
    %c0_24 = arith.constant 0 : index
    %c0_25 = arith.constant 0 : index
    %45 = vector.load %arg13[%c0_23, %c0_24, %c0_25] : memref<1x8x1xf32, #tpu.memory_space<vmem>>, vector<1x8x1xf32>
    tpu.vector_store %arg13[%c0_23, %c0_24, %c0_25], %44 {strides = array<i32>} : memref<1x8x1xf32, #tpu.memory_space<vmem>>, vector<1x8x1xf32>,
    %c0_26 = arith.constant 0 : index
    %c0_27 = arith.constant 0 : index
    %c0_28 = arith.constant 0 : index
    %46 = vector.load %arg14[%c0_26, %c0_27, %c0_28] : memref<1x8x128xf32, #tpu.memory_space<vmem>>, vector<1x8x128xf32>
    %47 = vector.broadcast %36 : vector<1x8x1xf32> to vector<1x8x128xf32>
    %48 = arith.mulf %47, %46 : vector<1x8x128xf32>
    %49 = arith.truncf %39 : vector<1x8x16xf32> to vector<1x8x16xbf16>
    %c0_29 = arith.constant 0 : index
    %c0_30 = arith.constant 0 : index
    %c0_31 = arith.constant 0 : index
    %50 = vector.load %arg6[%c0_29, %c0_30, %c0_31] : memref<1x16x128xbf16, #tpu.memory_space<vmem>>, vector<1x16x128xbf16>
    "tpu.trace_start"() <{level = 10 : i32, message = "bqk,bkd->bqd"}> : () -> ()
    %cst_32 = arith.constant dense<0.000000e+00> : vector<1x8x128xf32>
    %51 = tpu.matmul %49, %50, %cst_32 {dimension_numbers = #tpu.dot_dimension_numbers<[2], [1], [1], [2], [0, 0, 0, 1, 1, 2], [0], [0]>} : vector<1x8x16xbf16>, vector<1x16x128xbf16>, vector<1x8x128xf32> -> vector<1x8x128xf32>
    "tpu.trace_stop"() : () -> ()
    %52 = arith.addf %48, %51 : vector<1x8x128xf32>
    %c0_33 = arith.constant 0 : index
    %c0_34 = arith.constant 0 : index
    %c0_35 = arith.constant 0 : index
    %53 = vector.load %arg14[%c0_33, %c0_34, %c0_35] : memref<1x8x128xf32, #tpu.memory_space<vmem>>, vector<1x8x128xf32>
    tpu.vector_store %arg14[%c0_33, %c0_34, %c0_35], %52 {strides = array<i32>} : memref<1x8x128xf32, #tpu.memory_space<vmem>>, vector<1x8x128xf32>,
    %c0_36 = arith.constant 0 : index
    %c0_37 = arith.constant 0 : index
    %c0_38 = arith.constant 0 : index
    %54 = vector.load %arg12[%c0_36, %c0_37, %c0_38] : memref<1x8x1xf32, #tpu.memory_space<vmem>>, vector<1x8x1xf32>
    tpu.vector_store %arg12[%c0_36, %c0_37, %c0_38], %34 {strides = array<i32>} : memref<1x8x1xf32, #tpu.memory_space<vmem>>, vector<1x8x1xf32>,
    %c0_i32_39 = arith.constant 0 : i32
    %55 = arith.cmpi eq, %arg2, %c0_i32_39 : i32
    %56 = arith.extui %55 : i1 to i32
    %c0_i32_40 = arith.constant 0 : i32
    %57 = arith.cmpi ne, %56, %c0_i32_40 : i32
    scf.if %57 {
      %c0_41 = arith.constant 0 : index
      %c0_42 = arith.constant 0 : index
      %c0_43 = arith.constant 0 : index
      %58 = vector.load %arg13[%c0_41, %c0_42, %c0_43] : memref<1x8x1xf32, #tpu.memory_space<vmem>>, vector<1x8x1xf32>
      %59 = tpu.reciprocal %58 {approx = true} : vector<1x8x1xf32> -> vector<1x8x1xf32>
      %c0_44 = arith.constant 0 : index
      %c0_45 = arith.constant 0 : index
      %c0_46 = arith.constant 0 : index
      %60 = vector.load %arg14[%c0_44, %c0_45, %c0_46] : memref<1x8x128xf32, #tpu.memory_space<vmem>>, vector<1x8x128xf32>
      %61 = vector.broadcast %59 : vector<1x8x1xf32> to vector<1x8x128xf32>
      %62 = arith.mulf %60, %61 : vector<1x8x128xf32>
      %c0_47 = arith.constant 0 : index
      %c0_48 = arith.constant 0 : index
      %c0_49 = arith.constant 0 : index
      %63 = vector.load %arg10[%c0_47, %c0_48, %c0_49] : memref<1x8x128xf32, #tpu.memory_space<vmem>>, vector<1x8x128xf32>
      tpu.vector_store %arg10[%c0_47, %c0_48, %c0_49], %62 {strides = array<i32>} : memref<1x8x128xf32, #tpu.memory_space<vmem>>, vector<1x8x128xf32>,
    } else {
    }
    return
  }
  func.func @transform_0(%arg0: i32, %arg1: i32, %arg2: i32) -> (i32, i32, i32) {
    %c0_i32 = arith.constant 0 : i32
    %c0_i32_0 = arith.constant 0 : i32
    %c0_i32_1 = arith.constant 0 : i32
    return %arg0, %c0_i32, %c0_i32_0 : i32, i32, i32
  }
  func.func @transform_1(%arg0: i32, %arg1: i32, %arg2: i32) -> (i32, i32, i32) {
    %c0_i32 = arith.constant 0 : i32
    %c0_i32_0 = arith.constant 0 : i32
    return %arg0, %arg1, %c0_i32 : i32, i32, i32
  }
  func.func @transform_2(%arg0: i32, %arg1: i32, %arg2: i32) -> (i32, i32, i32) {
    %c0_i32 = arith.constant 0 : i32
    %c0_i32_0 = arith.constant 0 : i32
    return %arg0, %arg2, %c0_i32 : i32, i32, i32
  }
  func.func @transform_3(%arg0: i32, %arg1: i32, %arg2: i32) -> (i32, i32, i32) {
    %c0_i32 = arith.constant 0 : i32
    %c0_i32_0 = arith.constant 0 : i32
    return %arg0, %arg2, %c0_i32 : i32, i32, i32
  }
  func.func @transform_4(%arg0: i32, %arg1: i32, %arg2: i32) -> (i32, i32) {
    %c0_i32 = arith.constant 0 : i32
    %c0_i32_0 = arith.constant 0 : i32
    %c0_i32_1 = arith.constant 0 : i32
    return %c0_i32, %c0_i32_0 : i32, i32
  }
  func.func @transform_5(%arg0: i32, %arg1: i32, %arg2: i32) -> (i32, i32) {
    %c0_i32 = arith.constant 0 : i32
    %c0_i32_0 = arith.constant 0 : i32
    %c0_i32_1 = arith.constant 0 : i32
    return %c0_i32, %c0_i32_0 : i32, i32
  }
  func.func @transform_6(%arg0: i32, %arg1: i32, %arg2: i32) -> (i32, i32) {
    %c0_i32 = arith.constant 0 : i32
    %c0_i32_0 = arith.constant 0 : i32
    %c0_i32_1 = arith.constant 0 : i32
    return %c0_i32, %c0_i32_0 : i32, i32
  }
  func.func @transform_7(%arg0: i32, %arg1: i32, %arg2: i32) -> (i32, i32, i32) {
    %c0_i32 = arith.constant 0 : i32
    %c0_i32_0 = arith.constant 0 : i32
    return %arg0, %arg1, %c0_i32 : i32, i32, i32
  }
}

</mosaic_0001>

<llo_original>
// kernel: tpu_custom_call.1
$region0: #{tpu_custom_call.1}
  #allocation0 [shape = 'u32[]', space=smem, size = 0x4, offset = 0x4, fixed_abs, tag = 'smem constant byte address 0x4 - core index']
  #allocation1 [shape = 'u32[72,128]{1,0:T(1,128)}', space=vmem, size = 0x9000, scoped, tag = 'internal scratch']
  #allocation2 [shape = 'bf16[1,8,128]{2,1,0:T(8,128)(2,1)}', space=vmem, size = 0x800, scoped, tag = 'scratch operand']
  #allocation3 [shape = 'f32[1,8,1]{2,1,0:T(8,128)}', space=vmem, size = 0x1000, scoped, tag = 'scratch operand']
  #allocation4 [shape = 'f32[1,8,1]{2,1,0:T(8,128)}', space=vmem, size = 0x1000, scoped, tag = 'scratch operand']
  #allocation5 [shape = 'f32[1,8,128]{2,1,0:T(8,128)}', space=vmem, size = 0x1000, scoped, tag = 'scratch operand']
  %s0 = inlined_call_operand.vmem [shape: s32[2,1,1], index: 0, kind: input, shape index: {}]
  %s1 = inlined_call_operand.hbm [shape: bf16[2,8,32], index: 1, kind: input, shape index: {}]
  %s2 = inlined_call_operand.hbm [shape: bf16[2,16,32], index: 2, kind: input, shape index: {}]
  %s3 = inlined_call_operand.hbm [shape: bf16[2,16,128], index: 3, kind: input, shape index: {}]
  %s4 = inlined_call_operand.hbm [shape: bf16[32,128], index: 4, kind: input, shape index: {}]
  %s5 = inlined_call_operand.hbm [shape: bf16[32,128], index: 5, kind: input, shape index: {}]
  %s6 = inlined_call_operand.vmem [shape: bf16[1,128], index: 6, kind: input, shape index: {}]
  %s7 = inlined_call_operand.hbm [shape: f32[2,8,128], index: 7, kind: output, shape index: {}]
  %s8 = sld [smem:[#allocation0]]
  $region89: #{tpu_custom_call.1} parent=0
    _
  %s10 = ssub.s32 1, %s8
  %s11 = scalar_select 0, %s10, %s8
  $region1: #{tpu_custom_call.1} parent=0
    #allocation6 [shape = 'u8[4096]{0}', space=vmem, size = 0x1000, scoped, tag = 'input window, operand 1']
    #allocation7 [shape = 's32[2]{0}', space=sflag, size = 0x8, scoped, tag = 'scoped memory for tpu_custom_call.1']
    #allocation8 [shape = 's32[2]{0}', space=sflag, size = 0x8, scoped, tag = 'scoped memory for tpu_custom_call.1']
    #allocation9 [shape = 'u8[8192]{0}', space=vmem, size = 0x2000, scoped, tag = 'input window, operand 2']
    #allocation10 [shape = 's32[2]{0}', space=sflag, size = 0x8, scoped, tag = 'scoped memory for tpu_custom_call.1']
    #allocation11 [shape = 'u8[8192]{0}', space=vmem, size = 0x2000, scoped, tag = 'input window, operand 3']
    #allocation12 [shape = 'u8[8192]{0}', space=vmem, size = 0x2000, scoped, tag = 'input window, operand 4, single buffered']
    #allocation13 [shape = 's32[1]{0}', space=sflag, size = 0x4, scoped, tag = 'scoped memory for tpu_custom_call.1']
    #allocation14 [shape = 'u8[8192]{0}', space=vmem, size = 0x2000, scoped, tag = 'input window, operand 5, single buffered']
    #allocation15 [shape = 'u8[8192]{0}', space=vmem, size = 0x2000, scoped, tag = 'output window, operand 0']
    %12 = vsyncpa [#allocation7], 0
    %s13 = scalar_lea.sflag [#allocation7], 1
    %14 = vsyncpa %s13, 0
    %15 = vsyncpa [#allocation10], 0
    %s16 = scalar_lea.sflag [#allocation10], 1
    %17 = vsyncpa %s16, 0
    %18 = vsyncpa [#allocation13], 0
    %19 = vsyncpa [#allocation8], 0
    %s20 = scalar_lea.sflag [#allocation8], 1
    %21 = vsyncpa %s20, 0
    loop: start=0, step=1, limit=4
    $region2: #{tpu_custom_call.1} parent=1 // loop_pre_header
      _
    $region3: #{tpu_custom_call.1} parent=1 // loop_header
      %s23 = sphi 0, %s27
      %p24 = scmp.ge.s32.totalorder %s23, 4
      %s30 = sphi 0, %s49
      %s31 = sphi 0, %s45
      %s32 = sphi 0, %s41
      %s33 = sphi 0, %s30
      %s34 = sphi 0, %s31
      %s35 = sphi 0, %s32
      %s36 = sphi 0, %s33
      %s37 = sphi 0, %s34
      %s38 = sphi 0, %s35
      %s52 = sphi 0, %s54
      %s55 = sphi 0, %s52
      %s56 = sphi 0, %s55
      %s72 = sphi 0, %s56
      %s80 = sphi 0, %s82
      %s83 = sphi 0, %s80
      %s84 = sphi 0, %s83
      %s100 = sphi 0, %s84
      %s108 = sphi 0, %s110
      %s111 = sphi 0, %s108
      %s112 = sphi 0, %s111
      %s128 = sphi 0, %s112
      %s136 = sphi 0, %s138
      %s139 = sphi 0, %s136
      %s140 = sphi 0, %s139
      %s156 = sphi 0, %s140
      %s160 = sphi 0, %s160
      %s162 = sphi 0, %s160
      %s163 = sphi 0, %s162
      %s177 = sphi 0, %s163
      %s181 = sphi 0, %s181
      %s183 = sphi 0, %s181
      %s184 = sphi 0, %s183
      %s198 = sphi 0, %s184
      %s202 = sphi 0, %s202
      %s204 = sphi 0, %s202
      %s205 = sphi 0, %s204
      %s219 = sphi 0, %s205
      %s227 = sphi 0, %s229
      %s230 = sphi 0, %s227
      %s231 = sphi 0, %s230
      %s247 = sphi 0, %s231
    $region4: #{tpu_custom_call.1} parent=1 // loop_header_branch
      %26 = sbr.rel (%p24) target = $region8
    $region5: #{tpu_custom_call.1} parent=1 // loop_body
      %s28 = ssub.s32 %s23, 1
      %s29 = ssub.s32 %s23, 2
      %s39 = sadd.s32 1, %s32
      %p40 = scmp.ge.s32.totalorder %s39, 1
      %s41 = scalar_select %p40, 0, %s39
      %s42 = sadd.s32 1, %s31
      %s43 = scalar_select %p40, %s42, %s31
      %p44 = scmp.ge.s32.totalorder %s43, 1
      %s45 = scalar_select %p44, 0, %s43
      %s46 = sadd.s32 1, %s30
      %s47 = scalar_select %p44, %s46, %s30
      %p48 = scmp.ge.s32.totalorder %s47, 2
      %s49 = scalar_select %p48, 0, %s47
      %s50 = ssub.s32 %s30, %s49
      %p51 = scmp.eq.s32.totalorder %s50, 0
      %s53 = sadd.s32 %s52, 1
      %s54 = scalar_select %p51, %s52, %s53
      %p57 = pneg %p51
      %p58 = scmp.eq.s32.totalorder %s23, 1
      %p59 = por %p57, %p58
      %p60 = scmp.ne.s32.totalorder %s52, %s55
      %p61 = scmp.eq.s32.totalorder %s23, 0
      %p62 = por %p60, %p61
      %p63 = scmp.ne.s32.totalorder %s52, %s55
      %p64 = scmp.eq.s32.totalorder %s28, 1
      %p65 = por %p63, %p64
      %p66 = scmp.ne.s32.totalorder %s55, %s56
      %p67 = scmp.eq.s32.totalorder %s28, 0
      %p68 = por %p66, %p67
      %p69 = scmp.ne.s32.totalorder %s55, %s56
      %p70 = scmp.eq.s32.totalorder %s29, 1
      %p71 = por %p69, %p70
      %p73 = scmp.ne.s32.totalorder %s56, %s72
      %p74 = scmp.eq.s32.totalorder %s29, 0
      %p75 = por %p73, %p74
      %s76 = ssub.s32 %s30, %s49
      %s77 = ssub.s32 %s31, %s45
      %s78 = sor.u32 %s76, %s77
      %p79 = scmp.eq.s32.totalorder %s78, 0
      %s81 = sadd.s32 %s80, 1
      %s82 = scalar_select %p79, %s80, %s81
      %p85 = pneg %p79
      %p86 = scmp.eq.s32.totalorder %s23, 1
      %p87 = por %p85, %p86
      %p88 = scmp.ne.s32.totalorder %s80, %s83
      %p89 = scmp.eq.s32.totalorder %s23, 0
      %p90 = por %p88, %p89
      %p91 = scmp.ne.s32.totalorder %s80, %s83
      %p92 = scmp.eq.s32.totalorder %s28, 1
      %p93 = por %p91, %p92
      %p94 = scmp.ne.s32.totalorder %s83, %s84
      %p95 = scmp.eq.s32.totalorder %s28, 0
      %p96 = por %p94, %p95
      %p97 = scmp.ne.s32.totalorder %s83, %s84
      %p98 = scmp.eq.s32.totalorder %s29, 1
      %p99 = por %p97, %p98
      %p101 = scmp.ne.s32.totalorder %s84, %s100
      %p102 = scmp.eq.s32.totalorder %s29, 0
      %p103 = por %p101, %p102
      %s104 = ssub.s32 %s30, %s49
      %s105 = ssub.s32 %s32, %s41
      %s106 = sor.u32 %s104, %s105
      %p107 = scmp.eq.s32.totalorder %s106, 0
      %s109 = sadd.s32 %s108, 1
      %s110 = scalar_select %p107, %s108, %s109
      %p113 = pneg %p107
      %p114 = scmp.eq.s32.totalorder %s23, 1
      %p115 = por %p113, %p114
      %p116 = scmp.ne.s32.totalorder %s108, %s111
      %p117 = scmp.eq.s32.totalorder %s23, 0
      %p118 = por %p116, %p117
      %p119 = scmp.ne.s32.totalorder %s108, %s111
      %p120 = scmp.eq.s32.totalorder %s28, 1
      %p121 = por %p119, %p120
      %p122 = scmp.ne.s32.totalorder %s111, %s112
      %p123 = scmp.eq.s32.totalorder %s28, 0
      %p124 = por %p122, %p123
      %p125 = scmp.ne.s32.totalorder %s111, %s112
      %p126 = scmp.eq.s32.totalorder %s29, 1
      %p127 = por %p125, %p126
      %p129 = scmp.ne.s32.totalorder %s112, %s128
      %p130 = scmp.eq.s32.totalorder %s29, 0
      %p131 = por %p129, %p130
      %s132 = ssub.s32 %s30, %s49
      %s133 = ssub.s32 %s32, %s41
      %s134 = sor.u32 %s132, %s133
      %p135 = scmp.eq.s32.totalorder %s134, 0
      %s137 = sadd.s32 %s136, 1
      %s138 = scalar_select %p135, %s136, %s137
      %p141 = pneg %p135
      %p142 = scmp.eq.s32.totalorder %s23, 1
      %p143 = por %p141, %p142
      %p144 = scmp.ne.s32.totalorder %s136, %s139
      %p145 = scmp.eq.s32.totalorder %s23, 0
      %p146 = por %p144, %p145
      %p147 = scmp.ne.s32.totalorder %s136, %s139
      %p148 = scmp.eq.s32.totalorder %s28, 1
      %p149 = por %p147, %p148
      %p150 = scmp.ne.s32.totalorder %s139, %s140
      %p151 = scmp.eq.s32.totalorder %s28, 0
      %p152 = por %p150, %p151
      %p153 = scmp.ne.s32.totalorder %s139, %s140
      %p154 = scmp.eq.s32.totalorder %s29, 1
      %p155 = por %p153, %p154
      %p157 = scmp.ne.s32.totalorder %s140, %s156
      %p158 = scmp.eq.s32.totalorder %s29, 0
      %p159 = por %p157, %p158
      %s161 = sadd.s32 %s160, 1
      %p164 = scmp.eq.s32.totalorder %s23, 1
      %p165 = scmp.ne.s32.totalorder %s160, %s162
      %p166 = scmp.eq.s32.totalorder %s23, 0
      %p167 = por %p165, %p166
      %p168 = scmp.ne.s32.totalorder %s160, %s162
      %p169 = scmp.eq.s32.totalorder %s28, 1
      %p170 = por %p168, %p169
      %p171 = scmp.ne.s32.totalorder %s162, %s163
      %p172 = scmp.eq.s32.totalorder %s28, 0
      %p173 = por %p171, %p172
      %p174 = scmp.ne.s32.totalorder %s162, %s163
      %p175 = scmp.eq.s32.totalorder %s29, 1
      %p176 = por %p174, %p175
      %p178 = scmp.ne.s32.totalorder %s163, %s177
      %p179 = scmp.eq.s32.totalorder %s29, 0
      %p180 = por %p178, %p179
      %s182 = sadd.s32 %s181, 1
      %p185 = scmp.eq.s32.totalorder %s23, 1
      %p186 = scmp.ne.s32.totalorder %s181, %s183
      %p187 = scmp.eq.s32.totalorder %s23, 0
      %p188 = por %p186, %p187
      %p189 = scmp.ne.s32.totalorder %s181, %s183
      %p190 = scmp.eq.s32.totalorder %s28, 1
      %p191 = por %p189, %p190
      %p192 = scmp.ne.s32.totalorder %s183, %s184
      %p193 = scmp.eq.s32.totalorder %s28, 0
      %p194 = por %p192, %p193
      %p195 = scmp.ne.s32.totalorder %s183, %s184
      %p196 = scmp.eq.s32.totalorder %s29, 1
      %p197 = por %p195, %p196
      %p199 = scmp.ne.s32.totalorder %s184, %s198
      %p200 = scmp.eq.s32.totalorder %s29, 0
      %p201 = por %p199, %p200
      %s203 = sadd.s32 %s202, 1
      %p206 = scmp.eq.s32.totalorder %s23, 1
      %p207 = scmp.ne.s32.totalorder %s202, %s204
      %p208 = scmp.eq.s32.totalorder %s23, 0
      %p209 = por %p207, %p208
      %p210 = scmp.ne.s32.totalorder %s202, %s204
      %p211 = scmp.eq.s32.totalorder %s28, 1
      %p212 = por %p210, %p211
      %p213 = scmp.ne.s32.totalorder %s204, %s205
      %p214 = scmp.eq.s32.totalorder %s28, 0
      %p215 = por %p213, %p214
      %p216 = scmp.ne.s32.totalorder %s204, %s205
      %p217 = scmp.eq.s32.totalorder %s29, 1
      %p218 = por %p216, %p217
      %p220 = scmp.ne.s32.totalorder %s205, %s219
      %p221 = scmp.eq.s32.totalorder %s29, 0
      %p222 = por %p220, %p221
      %s223 = ssub.s32 %s30, %s49
      %s224 = ssub.s32 %s31, %s45
      %s225 = sor.u32 %s223, %s224
      %p226 = scmp.eq.s32.totalorder %s225, 0
      %s228 = sadd.s32 %s227, 1
      %s229 = scalar_select %p226, %s227, %s228
      %p232 = pneg %p226
      %p233 = scmp.eq.s32.totalorder %s23, 1
      %p234 = por %p232, %p233
      %p235 = scmp.ne.s32.totalorder %s227, %s230
      %p236 = scmp.eq.s32.totalorder %s23, 0
      %p237 = por %p235, %p236
      %p238 = scmp.ne.s32.totalorder %s227, %s230
      %p239 = scmp.eq.s32.totalorder %s28, 1
      %p240 = por %p238, %p239
      %p241 = scmp.ne.s32.totalorder %s230, %s231
      %p242 = scmp.eq.s32.totalorder %s28, 0
      %p243 = por %p241, %p242
      %p244 = scmp.ne.s32.totalorder %s230, %s231
      %p245 = scmp.eq.s32.totalorder %s29, 1
      %p246 = por %p244, %p245
      %p248 = scmp.ne.s32.totalorder %s231, %s247
      %p249 = scmp.eq.s32.totalorder %s29, 0
      %p250 = por %p248, %p249
      %p251 = scmp.le.s32.totalorder 1, %s23
      %p252 = scmp.lt.s32.totalorder %s23, 3
      %p253 = pnand %p251, %p252
      %p254 = pneg %p253
      // Predicated region
      $region9: #{tpu_custom_call.1} parent=5 // pred_check
        _
      $region10: #{tpu_custom_call.1} parent=5 // pred_check_branch
        %256 = sbr.rel (%p253) target = $region12
      $region11: #{tpu_custom_call.1} parent=5 // pred_region
        %s257 = ssub.s32 %s23, 1
        // Predicated region
        $region13: #{tpu_custom_call.1} parent=11 // pred_check
          %p258 = pneg %p173
        $region14: #{tpu_custom_call.1} parent=11 // pred_check_branch
          %260 = sbr.rel (%p258) target = $region16
        $region15: #{tpu_custom_call.1} parent=11 // pred_region
          %262 = vsyncadd [#allocation13], 0
          %s263 = sshll.u32 %s4, 4
          %s264 = int_to_ptr.hbm [resolvable:$true] %s263
          %s265 = sshll.u32 [#allocation12], 4
          %s266 = int_to_ptr.vmem [resolvable:$true] %s265
          %271 = dma.hbm_to_vmem [thread:$0]  %s264, 256, %s266, [#allocation13], 64, 64, 4
        $region16: #{tpu_custom_call.1} parent=11 // pred_fallthru
          _
        // Predicated region
        $region17: #{tpu_custom_call.1} parent=11 // pred_check
          %p272 = pneg %p194
        $region18: #{tpu_custom_call.1} parent=11 // pred_check_branch
          %274 = sbr.rel (%p272) target = $region20
        $region19: #{tpu_custom_call.1} parent=11 // pred_region
          %276 = vsyncadd [#allocation13], 0
          %s277 = sshll.u32 %s5, 4
          %s278 = int_to_ptr.hbm [resolvable:$true] %s277
          %s279 = sshll.u32 [#allocation14], 4
          %s280 = int_to_ptr.vmem [resolvable:$true] %s279
          %285 = dma.hbm_to_vmem [thread:$0]  %s278, 256, %s280, [#allocation13], 64, 64, 4
        $region20: #{tpu_custom_call.1} parent=11 // pred_fallthru
          _
        // Predicated region
        $region21: #{tpu_custom_call.1} parent=11 // pred_check
          %p286 = pneg %p215
        $region22: #{tpu_custom_call.1} parent=11 // pred_check_branch
          %288 = sbr.rel (%p286) target = $region24
        $region23: #{tpu_custom_call.1} parent=11 // pred_region
          _
        $region24: #{tpu_custom_call.1} parent=11 // pred_fallthru
          _
      $region12: #{tpu_custom_call.1} parent=5 // pred_fallthru
        _
      %p289 = scmp.lt.s32.totalorder %s23, 2
      // Predicated region
      $region25: #{tpu_custom_call.1} parent=5 // pred_check
        %p290 = pneg %p289
      $region26: #{tpu_custom_call.1} parent=5 // pred_check_branch
        %292 = sbr.rel (%p290) target = $region28
      $region27: #{tpu_custom_call.1} parent=5 // pred_region
        // Predicated region
        $region29: #{tpu_custom_call.1} parent=27 // pred_check
          %p293 = pneg %p62
        $region30: #{tpu_custom_call.1} parent=27 // pred_check_branch
          %295 = sbr.rel (%p293) target = $region32
        $region31: #{tpu_custom_call.1} parent=27 // pred_region
          %p296 = scmp.lt.s32.totalorder %s30, 1
          %s297 = scalar_select %p296, %s30, 1
          %s298 = scalar_lea.vmem %s0, %s297
        $region32: #{tpu_custom_call.1} parent=27 // pred_fallthru
          _
        // Predicated region
        $region33: #{tpu_custom_call.1} parent=27 // pred_check
          %p299 = pneg %p90
        $region34: #{tpu_custom_call.1} parent=27 // pred_check_branch
          %301 = sbr.rel (%p299) target = $region36
        $region35: #{tpu_custom_call.1} parent=27 // pred_region
          %s302 = sand.u32 %s80, 1
          %s303 = scalar_lea.sflag [#allocation7], %s302
          %s304 = sand.u32 %s80, 1
          %s305 = smul.addr %s304, 4
          %s306 = scalar_lea.vmem [#allocation6], %s305
          %308 = vsyncadd %s303, 0
          %s309 = sadd.s32 %s31, %s30
          %s310 = smul.addr %s309, 4
          %s311 = scalar_lea.hbm %s1, %s310
          %s313 = sshll.u32 %s311, 4
          %s314 = int_to_ptr.hbm [resolvable:$true] %s313
          %s315 = sshll.u32 %s306, 4
          %s316 = int_to_ptr.vmem [resolvable:$true] %s315
          %318 = dma.hbm_to_vmem [thread:$0]  %s314, 64, %s316, %s303
        $region36: #{tpu_custom_call.1} parent=27 // pred_fallthru
          _
        // Predicated region
        $region37: #{tpu_custom_call.1} parent=27 // pred_check
          %p319 = pneg %p118
        $region38: #{tpu_custom_call.1} parent=27 // pred_check_branch
          %321 = sbr.rel (%p319) target = $region40
        $region39: #{tpu_custom_call.1} parent=27 // pred_region
          %s322 = sand.u32 %s23, 1
          %s323 = scalar_lea.sflag [#allocation10], %s322
          %s324 = sand.u32 %s108, 1
          %s325 = smul.addr %s324, 8
          %s326 = scalar_lea.vmem [#allocation9], %s325
          %s327 = smul.u32 2, %s32
          %329 = vsyncadd %s323, 0
          %s330 = smul.addr %s30, 2
          %s331 = sadd.s32 %s327, %s330
          %s332 = smul.addr %s331, 4
          %s333 = scalar_lea.hbm %s2, %s332
          %s334 = sshll.u32 %s333, 4
          %s335 = int_to_ptr.hbm [resolvable:$true] %s334
          %s336 = sshll.u32 %s326, 4
          %s337 = int_to_ptr.vmem [resolvable:$true] %s336
          %342 = dma.hbm_to_vmem [thread:$0]  %s335, 128, %s337, %s323, 64, 64, 4
        $region40: #{tpu_custom_call.1} parent=27 // pred_fallthru
          _
        // Predicated region
        $region41: #{tpu_custom_call.1} parent=27 // pred_check
          %p343 = pneg %p146
        $region42: #{tpu_custom_call.1} parent=27 // pred_check_branch
          %345 = sbr.rel (%p343) target = $region44
        $region43: #{tpu_custom_call.1} parent=27 // pred_region
          %s346 = sand.u32 %s23, 1
          %s347 = scalar_lea.sflag [#allocation10], %s346
          %s348 = sand.u32 %s136, 1
          %s349 = smul.addr %s348, 8
          %s350 = scalar_lea.vmem [#allocation11], %s349
          %s351 = smul.u32 2, %s32
          %353 = vsyncadd %s347, 0
          %s354 = smul.addr %s30, 2
          %s355 = sadd.s32 %s351, %s354
          %s356 = smul.addr %s355, 4
          %s357 = scalar_lea.hbm %s3, %s356
          %s358 = sshll.u32 %s357, 4
          %s359 = int_to_ptr.hbm [resolvable:$true] %s358
          %s360 = sshll.u32 %s350, 4
          %s361 = int_to_ptr.vmem [resolvable:$true] %s360
          %366 = dma.hbm_to_vmem [thread:$0]  %s359, 128, %s361, %s347, 64, 64, 4
        $region44: #{tpu_custom_call.1} parent=27 // pred_fallthru
          _
      $region28: #{tpu_custom_call.1} parent=5 // pred_fallthru
        _
      %p367 = scmp.le.s32.totalorder 1, %s23
      %p368 = scmp.lt.s32.totalorder %s23, 3
      %p369 = pnand %p367, %p368
      %p370 = pneg %p369
      // Predicated region
      $region45: #{tpu_custom_call.1} parent=5 // pred_check
        _
      $region46: #{tpu_custom_call.1} parent=5 // pred_check_branch
        %372 = sbr.rel (%p369) target = $region48
      $region47: #{tpu_custom_call.1} parent=5 // pred_region
        %s373 = ssub.s32 %s23, 1
        %s374 = sand.u32 %s83, 1
        %s375 = scalar_lea.sflag [#allocation7], %s374
        %s376 = sand.u32 %s83, 1
        %s377 = smul.addr %s376, 4
        %s378 = scalar_lea.vmem [#allocation6], %s377
        // Predicated region
        $region49: #{tpu_custom_call.1} parent=47 // pred_check
          %p379 = pneg %p96
        $region50: #{tpu_custom_call.1} parent=47 // pred_check_branch
          %381 = sbr.rel (%p379) target = $region52
        $region51: #{tpu_custom_call.1} parent=47 // pred_region
          %383 = dma.done %s375, 64
        $region52: #{tpu_custom_call.1} parent=47 // pred_fallthru
          _
        %s384 = sand.u32 %s28, 1
        %s385 = scalar_lea.sflag [#allocation10], %s384
        %s386 = sand.u32 %s111, 1
        %s387 = smul.addr %s386, 8
        %s388 = scalar_lea.vmem [#allocation9], %s387
        // Predicated region
        $region53: #{tpu_custom_call.1} parent=47 // pred_check
          %p389 = pneg %p124
        $region54: #{tpu_custom_call.1} parent=47 // pred_check_branch
          %391 = sbr.rel (%p389) target = $region56
        $region55: #{tpu_custom_call.1} parent=47 // pred_region
          %393 = dma.done %s385, 128
        $region56: #{tpu_custom_call.1} parent=47 // pred_fallthru
          _
        %s394 = sand.u32 %s28, 1
        %s395 = scalar_lea.sflag [#allocation10], %s394
        %s396 = sand.u32 %s139, 1
        %s397 = smul.addr %s396, 8
        %s398 = scalar_lea.vmem [#allocation11], %s397
        // Predicated region
        $region57: #{tpu_custom_call.1} parent=47 // pred_check
          %p399 = pneg %p152
        $region58: #{tpu_custom_call.1} parent=47 // pred_check_branch
          %401 = sbr.rel (%p399) target = $region60
        $region59: #{tpu_custom_call.1} parent=47 // pred_region
          %403 = dma.done %s395, 128
        $region60: #{tpu_custom_call.1} parent=47 // pred_fallthru
          _
        // Predicated region
        $region61: #{tpu_custom_call.1} parent=47 // pred_check
          %p404 = pneg %p173
        $region62: #{tpu_custom_call.1} parent=47 // pred_check_branch
          %406 = sbr.rel (%p404) target = $region64
        $region63: #{tpu_custom_call.1} parent=47 // pred_region
          %408 = dma.done [#allocation13], 256
        $region64: #{tpu_custom_call.1} parent=47 // pred_fallthru
          _
        // Predicated region
        $region65: #{tpu_custom_call.1} parent=47 // pred_check
          %p409 = pneg %p194
        $region66: #{tpu_custom_call.1} parent=47 // pred_check_branch
          %411 = sbr.rel (%p409) target = $region68
        $region67: #{tpu_custom_call.1} parent=47 // pred_region
          %413 = dma.done [#allocation13], 256
        $region68: #{tpu_custom_call.1} parent=47 // pred_fallthru
          _
        %p414 = scmp.lt.s32.totalorder %s33, 1
        %s415 = scalar_select %p414, %s33, 1
        %s416 = scalar_lea.vmem %s0, %s415
        %p417 = pneg %p68
        %p418 = pneg %p65
        %s419 = sand.u32 %s83, 1
        %s420 = scalar_lea.sflag [#allocation7], %s419
        %s421 = sand.u32 %s83, 1
        %s422 = smul.addr %s421, 4
        %s423 = scalar_lea.vmem [#allocation6], %s422
        %p424 = pneg %p96
        %p425 = pneg %p93
        %s426 = sand.u32 %s28, 1
        %s427 = scalar_lea.sflag [#allocation10], %s426
        %s428 = sand.u32 %s111, 1
        %s429 = smul.addr %s428, 8
        %s430 = scalar_lea.vmem [#allocation9], %s429
        %p431 = pneg %p124
        %p432 = pneg %p121
        %s433 = sand.u32 %s28, 1
        %s434 = scalar_lea.sflag [#allocation10], %s433
        %s435 = sand.u32 %s139, 1
        %s436 = smul.addr %s435, 8
        %s437 = scalar_lea.vmem [#allocation11], %s436
        %p438 = pneg %p152
        %p439 = pneg %p149
        %p440 = pneg %p173
        %p441 = pneg %p170
        %p442 = pneg %p194
        %p443 = pneg %p191
        %p444 = pneg %p215
        %p445 = pneg %p212
        %p446 = pneg %p243
        %p447 = pneg %p240
        %s448 = sand.u32 %s230, 1
        %s449 = scalar_lea.sflag [#allocation8], %s448
        %s450 = sand.u32 %s230, 1
        %s451 = smul.addr %s450, 8
        %s452 = scalar_lea.vmem [#allocation15], %s451
        %p453 = scmp.lt.s32.totalorder %s33, 1
        %s454 = scalar_select %p453, %s33, 1
        %s455 = scalar_lea.vmem %s0, %s454
        %s456 = smul.u32 2, %s35
        %s457 = smul.u32 2, %s35
        %p459 = scmp.eq.s32.totalorder %s35, 0
        // Predicated region
        $region69: #{tpu_custom_call.1} parent=47 // pred_check
          %p460 = pneg %p459
        $region70: #{tpu_custom_call.1} parent=47 // pred_check_branch
          %462 = sbr.rel (%p460) target = $region72
        $region71: #{tpu_custom_call.1} parent=47 // pred_region
          %v463 = vld [vmem:[%s378] sm:$0xf]
          %v464 = vld [vmem:[#allocation12] sm:$0xf]
          %v465 = vld [vmem:[#allocation12 + $0x4] sm:$0xf]
          %v466 = vld [vmem:[#allocation12 + $0x8] sm:$0xf]
          %v467 = vld [vmem:[#allocation12 + $0xc] sm:$0xf]
          %v472 = vunpack.c.l.b16 %v464
          %v473 = vunpack.c.l.b16 %v465
          %v474 = vunpack.c.l.b16 %v466
          %v475 = vunpack.c.l.b16 %v467
          %v476 = vpack.c.b16 %v473, %v472
          %v477 = vpack.c.b16 %v475, %v474
          %vm480 = vcmask 261120
          %v482 = vsel %vm480, %v463, 0
          %484 = vmatpush.bf16.msra.mxu0 0
          %485 = vmatpush.bf16.msra.mxu0 0
          %486 = vmatpush.bf16.msra.mxu0 0
          %487 = vmatpush.bf16.msra.mxu0 0
          %488 = vmatpush.bf16.msra.mxu0 0
          %489 = vmatpush.bf16.msra.mxu0 0
          %490 = vmatpush.bf16.msra.mxu0 %v477
          %491 = vmatpush.bf16.msra.mxu0 %v476
          %492 = vmatmul.bf16.gmra.mxu0 %v482
          %v493 = vpop.f32.mrf.mxu0
          %v494 = vadd.f32 0.0, %v493
          %v495 = vpop.f32.mrf.mxu0
          %496 = vdwg.mxu0
          %v497 = vpack.c.bf16 %v494, %v494
          %498 = vst [vmem:[#allocation2] sm:$0xf] %v497
          %vm499 = vcmask 7168
          %500 = vst.msk [vmem:[#allocation3] sm:$0xff] %vm499, -inf
          %501 = vst.msk [vmem:[#allocation4] sm:$0xff] %vm499, 0.0
          %502 = vst [vmem:[#allocation5] sm:$0xff] 0.0
        $region72: #{tpu_custom_call.1} parent=47 // pred_fallthru
          _
        %v503 = vld [vmem:[%s388] sm:$0xf]
        %v504 = vld [vmem:[%s388 + $0x4] sm:$0xf]
        %v505 = vld [vmem:[#allocation14] sm:$0xf]
        %v506 = vld [vmem:[#allocation14 + $0x4] sm:$0xf]
        %v507 = vld [vmem:[#allocation14 + $0x8] sm:$0xf]
        %v508 = vld [vmem:[#allocation14 + $0xc] sm:$0xf]
        %v511 = vunpack.c.l.b16 %v503
        %v512 = vunpack.c.l.b16 %v504
        %v513 = vpack.c.b16 %v512, %v511
        %v518 = vunpack.c.l.b16 %v505
        %v519 = vunpack.c.l.b16 %v506
        %v520 = vunpack.c.l.b16 %v507
        %v521 = vunpack.c.l.b16 %v508
        %v522 = vpack.c.b16 %v519, %v518
        %v523 = vpack.c.b16 %v521, %v520
        %vm526 = vcmask 261120
        %v528 = vsel %vm526, %v513, 0
        %530 = vmatpush.bf16.msra.mxu0 0
        %531 = vmatpush.bf16.msra.mxu0 0
        %532 = vmatpush.bf16.msra.mxu0 0
        %533 = vmatpush.bf16.msra.mxu0 0
        %534 = vmatpush.bf16.msra.mxu0 0
        %535 = vmatpush.bf16.msra.mxu0 0
        %536 = vmatpush.bf16.msra.mxu0 %v523
        %537 = vmatpush.bf16.msra.mxu0 %v522
        %538 = vmatmul.bf16.gmra.mxu0 %v528
        %v539 = vpop.f32.mrf.mxu0
        %v540 = vadd.f32 0.0, %v539
        %v541 = vpop.f32.mrf.mxu0
        %v542 = vadd.f32 0.0, %v541
        %543 = vdwg.mxu0
        %v544 = vpack.c.bf16 %v540, %v540
        %v545 = vpack.c.bf16 %v542, %v542
        %v546 = vld [vmem:[#allocation2] sm:$0xf]
        %v548 = vrot.slane %v546, 3
        %vm549 = vcmask 1040384
        %v552 = vsel %vm549, %v546, %v548
        %vm554 = vcmask 1041409
        %v555 = vsel %vm554, %v546, %v548
        %v557 = vrot.slane %v555, 1
        %vm558 = vcmask 1042434
        %v559 = vsel %vm558, %v546, %v548
        %v561 = vrot.slane %v559, 2
        %vm562 = vcmask 1043459
        %v563 = vsel %vm562, %v546, %v548
        %v565 = vrot.slane %v563, 3
        %v566 = vunpack.i.l.s16 %v552
        %v567 = vunpack.i.h.s16 %v552
        %v568 = vunpack.i.l.s16 %v557
        %v569 = vunpack.i.h.s16 %v557
        %v570 = vunpack.i.l.s16 %v561
        %v571 = vunpack.i.h.s16 %v561
        %v572 = vunpack.i.l.s16 %v565
        %v573 = vunpack.i.h.s16 %v565
        %v574 = vpack.i.b16 %v566, %v566
        %v575 = vpack.i.b16 %v567, %v567
        %v576 = vpack.i.b16 %v568, %v568
        %v577 = vpack.i.b16 %v569, %v569
        %v578 = vpack.i.b16 %v570, %v570
        %v579 = vpack.i.b16 %v571, %v571
        %v580 = vpack.i.b16 %v572, %v572
        %v581 = vpack.i.b16 %v573, %v573
        %v582 = vperm.slane %v574, 0
        %v583 = vperm.slane %v575, 0
        %v584 = vperm.slane %v576, 0
        %v585 = vperm.slane %v577, 0
        %v586 = vperm.slane %v578, 0
        %v587 = vperm.slane %v579, 0
        %v588 = vperm.slane %v580, 0
        %v589 = vperm.slane %v581, 0
        %v591 = vpack.i.b16 %v582, %v582
        %v593 = vperm.slane %v591, 0
        %v595 = vpack.i.b16 %v583, %v583
        %v597 = vperm.slane %v595, 0
        %v599 = vpack.i.b16 %v584, %v584
        %v601 = vperm.slane %v599, 0
        %v603 = vpack.i.b16 %v585, %v585
        %v605 = vperm.slane %v603, 0
        %v607 = vpack.i.b16 %v586, %v586
        %v609 = vperm.slane %v607, 0
        %v611 = vpack.i.b16 %v587, %v587
        %v613 = vperm.slane %v611, 0
        %v615 = vpack.i.b16 %v588, %v588
        %v617 = vperm.slane %v615, 0
        %v619 = vpack.i.b16 %v589, %v589
        %v621 = vperm.slane %v619, 0
        %v622 = vunpack.c.l.bf16 %v593
        %v623 = vunpack.c.l.bf16 %v597
        %v624 = vunpack.c.l.bf16 %v601
        %v625 = vunpack.c.l.bf16 %v605
        %v626 = vunpack.c.l.bf16 %v609
        %v627 = vunpack.c.l.bf16 %v613
        %v628 = vunpack.c.l.bf16 %v617
        %v629 = vunpack.c.l.bf16 %v621
        %v630 = vunpack.c.l.bf16 %v544
        %v631 = vunpack.c.l.bf16 %v545
        %v632 = vadd.f32 %v622, %v630
        %v633 = vadd.f32 %v622, %v631
        %v634 = vadd.f32 %v623, %v630
        %v635 = vadd.f32 %v623, %v631
        %v636 = vadd.f32 %v624, %v630
        %v637 = vadd.f32 %v624, %v631
        %v638 = vadd.f32 %v625, %v630
        %v639 = vadd.f32 %v625, %v631
        %v640 = vadd.f32 %v626, %v630
        %v641 = vadd.f32 %v626, %v631
        %v642 = vadd.f32 %v627, %v630
        %v643 = vadd.f32 %v627, %v631
        %v644 = vadd.f32 %v628, %v630
        %v645 = vadd.f32 %v628, %v631
        %v646 = vadd.f32 %v629, %v630
        %v647 = vadd.f32 %v629, %v631
        %v648 = vpack.c.bf16 %v632, %v632
        %v649 = vpack.c.bf16 %v633, %v633
        %v650 = vpack.c.bf16 %v634, %v634
        %v651 = vpack.c.bf16 %v635, %v635
        %v652 = vpack.c.bf16 %v636, %v636
        %v653 = vpack.c.bf16 %v637, %v637
        %v654 = vpack.c.bf16 %v638, %v638
        %v655 = vpack.c.bf16 %v639, %v639
        %v656 = vpack.c.bf16 %v640, %v640
        %v657 = vpack.c.bf16 %v641, %v641
        %v658 = vpack.c.bf16 %v642, %v642
        %v659 = vpack.c.bf16 %v643, %v643
        %v660 = vpack.c.bf16 %v644, %v644
        %v661 = vpack.c.bf16 %v645, %v645
        %v662 = vpack.c.bf16 %v646, %v646
        %v663 = vpack.c.bf16 %v647, %v647
        %v664 = vunpack.c.l.bf16 %v648
        %v665 = vunpack.c.l.bf16 %v649
        %v666 = vunpack.c.l.bf16 %v650
        %v667 = vunpack.c.l.bf16 %v651
        %v668 = vunpack.c.l.bf16 %v652
        %v669 = vunpack.c.l.bf16 %v653
        %v670 = vunpack.c.l.bf16 %v654
        %v671 = vunpack.c.l.bf16 %v655
        %v672 = vunpack.c.l.bf16 %v656
        %v673 = vunpack.c.l.bf16 %v657
        %v674 = vunpack.c.l.bf16 %v658
        %v675 = vunpack.c.l.bf16 %v659
        %v676 = vunpack.c.l.bf16 %v660
        %v677 = vunpack.c.l.bf16 %v661
        %v678 = vunpack.c.l.bf16 %v662
        %v679 = vunpack.c.l.bf16 %v663
        %v680 = vtanh.pop %v664
        %v681 = vtanh.pop %v665
        %v682 = vtanh.pop %v666
        %v683 = vtanh.pop %v667
        %v684 = vtanh.pop %v668
        %v685 = vtanh.pop %v669
        %v686 = vtanh.pop %v670
        %v687 = vtanh.pop %v671
        %v688 = vtanh.pop %v672
        %v689 = vtanh.pop %v673
        %v690 = vtanh.pop %v674
        %v691 = vtanh.pop %v675
        %v692 = vtanh.pop %v676
        %v693 = vtanh.pop %v677
        %v694 = vtanh.pop %v678
        %v695 = vtanh.pop %v679
        %v696 = vpack.c.bf16 %v680, %v680
        %v697 = vpack.c.bf16 %v681, %v681
        %v698 = vpack.c.bf16 %v682, %v682
        %v699 = vpack.c.bf16 %v683, %v683
        %v700 = vpack.c.bf16 %v684, %v684
        %v701 = vpack.c.bf16 %v685, %v685
        %v702 = vpack.c.bf16 %v686, %v686
        %v703 = vpack.c.bf16 %v687, %v687
        %v704 = vpack.c.bf16 %v688, %v688
        %v705 = vpack.c.bf16 %v689, %v689
        %v706 = vpack.c.bf16 %v690, %v690
        %v707 = vpack.c.bf16 %v691, %v691
        %v708 = vpack.c.bf16 %v692, %v692
        %v709 = vpack.c.bf16 %v693, %v693
        %v710 = vpack.c.bf16 %v694, %v694
        %v711 = vpack.c.bf16 %v695, %v695
        %v712 = vld [vmem:[%s6] sm:$0x1]
        %v714 = vpack.i.b16 %v712, %v712
        %v716 = vperm.slane %v714, 0
        %v717 = vunpack.c.l.bf16 %v696
        %v718 = vunpack.c.l.bf16 %v697
        %v719 = vunpack.c.l.bf16 %v698
        %v720 = vunpack.c.l.bf16 %v699
        %v721 = vunpack.c.l.bf16 %v700
        %v722 = vunpack.c.l.bf16 %v701
        %v723 = vunpack.c.l.bf16 %v702
        %v724 = vunpack.c.l.bf16 %v703
        %v725 = vunpack.c.l.bf16 %v704
        %v726 = vunpack.c.l.bf16 %v705
        %v727 = vunpack.c.l.bf16 %v706
        %v728 = vunpack.c.l.bf16 %v707
        %v729 = vunpack.c.l.bf16 %v708
        %v730 = vunpack.c.l.bf16 %v709
        %v731 = vunpack.c.l.bf16 %v710
        %v732 = vunpack.c.l.bf16 %v711
        %v733 = vunpack.c.l.bf16 %v716
        %v734 = vmul.f32 %v717, %v733
        %v735 = vmul.f32 %v718, %v733
        %v736 = vmul.f32 %v719, %v733
        %v737 = vmul.f32 %v720, %v733
        %v738 = vmul.f32 %v721, %v733
        %v739 = vmul.f32 %v722, %v733
        %v740 = vmul.f32 %v723, %v733
        %v741 = vmul.f32 %v724, %v733
        %v742 = vmul.f32 %v725, %v733
        %v743 = vmul.f32 %v726, %v733
        %v744 = vmul.f32 %v727, %v733
        %v745 = vmul.f32 %v728, %v733
        %v746 = vmul.f32 %v729, %v733
        %v747 = vmul.f32 %v730, %v733
        %v748 = vmul.f32 %v731, %v733
        %v749 = vmul.f32 %v732, %v733
        %v750 = vpack.c.bf16 %v735, %v734
        %v751 = vpack.c.bf16 %v737, %v736
        %v752 = vpack.c.bf16 %v739, %v738
        %v753 = vpack.c.bf16 %v741, %v740
        %v754 = vpack.c.bf16 %v743, %v742
        %v755 = vpack.c.bf16 %v745, %v744
        %v756 = vpack.c.bf16 %v747, %v746
        %v757 = vpack.c.bf16 %v749, %v748
        %v758 = vunpack.c.l.bf16 %v750
        %v759 = vunpack.c.h.bf16 %v750
        %v760 = vunpack.c.l.bf16 %v751
        %v761 = vunpack.c.h.bf16 %v751
        %v762 = vunpack.c.l.bf16 %v752
        %v763 = vunpack.c.h.bf16 %v752
        %v764 = vunpack.c.l.bf16 %v753
        %v765 = vunpack.c.h.bf16 %v753
        %v766 = vunpack.c.l.bf16 %v754
        %v767 = vunpack.c.h.bf16 %v754
        %v768 = vunpack.c.l.bf16 %v755
        %v769 = vunpack.c.h.bf16 %v755
        %v770 = vunpack.c.l.bf16 %v756
        %v771 = vunpack.c.h.bf16 %v756
        %v772 = vunpack.c.l.bf16 %v757
        %v773 = vunpack.c.h.bf16 %v757
        %774 = vadd.xlane.f32.xlu0 %v758
        %v775 = vpop.xlane.xlu0 %774
        %776 = vadd.xlane.f32.xlu0 %v759
        %v777 = vpop.xlane.xlu0 %776
        %778 = vadd.xlane.f32.xlu0 %v760
        %v779 = vpop.xlane.xlu0 %778
        %780 = vadd.xlane.f32.xlu0 %v761
        %v781 = vpop.xlane.xlu0 %780
        %782 = vadd.xlane.f32.xlu0 %v762
        %v783 = vpop.xlane.xlu0 %782
        %784 = vadd.xlane.f32.xlu0 %v763
        %v785 = vpop.xlane.xlu0 %784
        %786 = vadd.xlane.f32.xlu0 %v764
        %v787 = vpop.xlane.xlu0 %786
        %788 = vadd.xlane.f32.xlu0 %v765
        %v789 = vpop.xlane.xlu0 %788
        %790 = vadd.xlane.f32.xlu0 %v766
        %v791 = vpop.xlane.xlu0 %790
        %792 = vadd.xlane.f32.xlu0 %v767
        %v793 = vpop.xlane.xlu0 %792
        %794 = vadd.xlane.f32.xlu0 %v768
        %v795 = vpop.xlane.xlu0 %794
        %796 = vadd.xlane.f32.xlu0 %v769
        %v797 = vpop.xlane.xlu0 %796
        %798 = vadd.xlane.f32.xlu0 %v770
        %v799 = vpop.xlane.xlu0 %798
        %800 = vadd.xlane.f32.xlu0 %v771
        %v801 = vpop.xlane.xlu0 %800
        %802 = vadd.xlane.f32.xlu0 %v772
        %v803 = vpop.xlane.xlu0 %802
        %804 = vadd.xlane.f32.xlu0 %v773
        %v805 = vpop.xlane.xlu0 %804
        %s806 = smul.u32 %s35, 16
        %v807 = vlaneseq
        %v808 = vand.u32 %v807, 127
        %v809 = vstv %s806
        %v810 = vadd.s32 %v809, %v808
        %v811 = vld [vmem:[%s455] sm:$0x1]
        %v812 = vperm.slane %v811, 0
        %813 = vset.pattern.permute.xlu0 0
        %814 = vperm.xlu0 %813, %v812
        %v815 = vpop.permute.xlu0 %814
        %vm816 = vcmp.lt.s32.totalorder %v810, %v815
        %v833 = vperm.slane %v775, %v808
        %v834 = vadd.s32 %v808, 4294967288
        %v835 = vperm.slane %v777, %v834
        %vm836 = vcmask 130112
        %v837 = vsel %vm836, %v835, %v833
        %v838 = vperm.slane %v779, %v808
        %v839 = vperm.slane %v781, %v834
        %v840 = vsel %vm836, %v839, %v838
        %v841 = vperm.slane %v783, %v808
        %v842 = vperm.slane %v785, %v834
        %v843 = vsel %vm836, %v842, %v841
        %v844 = vperm.slane %v787, %v808
        %v845 = vperm.slane %v789, %v834
        %v846 = vsel %vm836, %v845, %v844
        %v847 = vperm.slane %v791, %v808
        %v848 = vperm.slane %v793, %v834
        %v849 = vsel %vm836, %v848, %v847
        %v850 = vperm.slane %v795, %v808
        %v851 = vperm.slane %v797, %v834
        %v852 = vsel %vm836, %v851, %v850
        %v853 = vperm.slane %v799, %v808
        %v854 = vperm.slane %v801, %v834
        %v855 = vsel %vm836, %v854, %v853
        %v856 = vperm.slane %v803, %v808
        %v857 = vperm.slane %v805, %v834
        %v858 = vsel %vm836, %v857, %v856
        %v859 = vsel %vm554, %v840, %v837
        %v860 = vsel %vm558, %v843, %v859
        %v861 = vsel %vm562, %v846, %v860
        %vm862 = vcmask 1044484
        %v863 = vsel %vm862, %v849, %v861
        %vm864 = vcmask 1045509
        %v865 = vsel %vm864, %v852, %v863
        %vm866 = vcmask 1046534
        %v867 = vsel %vm866, %v855, %v865
        %vm868 = vcmask 1047559
        %v869 = vsel %vm868, %v858, %v867
        %v871 = vsel %vm816, %v869, -1000000.0
        %v872 = vld [vmem:[#allocation3] sm:$0xff]
        %vm873 = vcmask 130048
        %v874 = vsel %vm873, %v871, -inf
        %875 = vmax.xlane.f32.xlu0 %v874
        %v876 = vpop.xlane.xlu0 %875
        %v877 = vmax.f32 %v872, %v876
        %v878 = vsub.f32 %v872, %v877
        %v879 = vmul.f32 %v878, 1.442695
        %v880 = vpow.pop %v879
        %882 = vset.pattern.permute.xlu0 0
        %883 = vperm.xlu0 %882, %v877
        %v884 = vpop.permute.xlu0 %883
        %v886 = vsub.f32 %v871, %v884
        %v887 = vmul.f32 %v886, 1.442695
        %v888 = vpow.pop %v887
        %v889 = vld [vmem:[#allocation4] sm:$0xff]
        %v890 = vmul.f32 %v880, %v889
        %v891 = vsel %vm873, %v888, 0.0
        %892 = vadd.xlane.f32.xlu0 %v891
        %v893 = vpop.xlane.xlu0 %892
        %v894 = vadd.f32 %v890, %v893
        %vm895 = vcmask 7168
        %896 = vst.msk [vmem:[#allocation4] sm:$0xff] %vm895, %v894
        %v897 = vld [vmem:[#allocation5] sm:$0xff]
        %899 = vset.pattern.permute.xlu0 0
        %900 = vperm.xlu0 %899, %v880
        %v901 = vpop.permute.xlu0 %900
        %v903 = vmul.f32 %v901, %v897
        %v904 = vpack.c.bf16 %v888, %v888
        %v905 = vld [vmem:[%s398] sm:$0xf]
        %v906 = vld [vmem:[%s398 + $0x4] sm:$0xf]
        %v909 = vunpack.c.l.b16 %v905
        %v910 = vunpack.c.l.b16 %v906
        %v911 = vpack.c.b16 %v910, %v909
        %v914 = vsel %vm873, %v904, 0
        %916 = vmatpush.bf16.msra.mxu0 0
        %917 = vmatpush.bf16.msra.mxu0 0
        %918 = vmatpush.bf16.msra.mxu0 0
        %919 = vmatpush.bf16.msra.mxu0 0
        %920 = vmatpush.bf16.msra.mxu0 0
        %921 = vmatpush.bf16.msra.mxu0 0
        %922 = vmatpush.bf16.msra.mxu0 0
        %923 = vmatpush.bf16.msra.mxu0 %v911
        %924 = vmatmul.bf16.gmra.mxu0 %v914
        %v925 = vpop.f32.mrf.mxu0
        %v926 = vadd.f32 0.0, %v925
        %v927 = vpop.f32.mrf.mxu0
        %928 = vdwg.mxu0
        %v929 = vadd.f32 %v903, %v926
        %930 = vst [vmem:[#allocation5] sm:$0xff] %v929
        %931 = vst.msk [vmem:[#allocation3] sm:$0xff] %vm895, %v877
        // Predicated region
        $region73: #{tpu_custom_call.1} parent=47 // pred_check
          %p932 = pneg %p459
        $region74: #{tpu_custom_call.1} parent=47 // pred_check_branch
          %934 = sbr.rel (%p932) target = $region76
        $region75: #{tpu_custom_call.1} parent=47 // pred_region
          %v935 = vld [vmem:[#allocation4] sm:$0xff]
          %v936 = vrcp.pop %v935
          %v937 = vld [vmem:[#allocation5] sm:$0xff]
          %939 = vset.pattern.permute.xlu0 0
          %940 = vperm.xlu0 %939, %v936
          %v941 = vpop.permute.xlu0 %940
          %v943 = vmul.f32 %v937, %v941
          %944 = vst [vmem:[%s452] sm:$0xff] %v943
        $region76: #{tpu_custom_call.1} parent=47 // pred_fallthru
          _
        %s945 = sand.u32 %s230, 1
        %s946 = scalar_lea.sflag [#allocation8], %s945
        %s947 = sand.u32 %s230, 1
        %s948 = smul.addr %s947, 8
        %s949 = scalar_lea.vmem [#allocation15], %s948
        // Predicated region
        $region77: #{tpu_custom_call.1} parent=47 // pred_check
          %p950 = pneg %p240
        $region78: #{tpu_custom_call.1} parent=47 // pred_check_branch
          %952 = sbr.rel (%p950) target = $region80
        $region79: #{tpu_custom_call.1} parent=47 // pred_region
          %954 = vsyncadd %s946, 0
          %s955 = sadd.s32 %s34, %s33
          %s956 = smul.addr %s955, 8
          %s957 = scalar_lea.hbm %s7, %s956
          %s959 = sshll.u32 %s949, 4
          %s960 = int_to_ptr.vmem [resolvable:$true] %s959
          %s961 = sshll.u32 %s957, 4
          %s962 = int_to_ptr.hbm [resolvable:$true] %s961
          %964 = dma.vmem_to_hbm [thread:$0]  %s960, 128, %s962, %s946
        $region80: #{tpu_custom_call.1} parent=47 // pred_fallthru
          _
      $region48: #{tpu_custom_call.1} parent=5 // pred_fallthru
        _
      %p965 = scmp.le.s32.totalorder 2, %s23
      // Predicated region
      $region81: #{tpu_custom_call.1} parent=5 // pred_check
        %p966 = pneg %p965
      $region82: #{tpu_custom_call.1} parent=5 // pred_check_branch
        %968 = sbr.rel (%p966) target = $region84
      $region83: #{tpu_custom_call.1} parent=5 // pred_region
        %s969 = ssub.s32 %s23, 2
        // Predicated region
        $region85: #{tpu_custom_call.1} parent=83 // pred_check
          %p970 = pneg %p246
        $region86: #{tpu_custom_call.1} parent=83 // pred_check_branch
          %972 = sbr.rel (%p970) target = $region88
        $region87: #{tpu_custom_call.1} parent=83 // pred_region
          %s973 = sand.u32 %s231, 1
          %s974 = scalar_lea.sflag [#allocation8], %s973
          %s975 = sand.u32 %s231, 1
          %s976 = smul.addr %s975, 8
          %s977 = scalar_lea.vmem [#allocation15], %s976
          %979 = dma.done %s974, 128
        $region88: #{tpu_custom_call.1} parent=83 // pred_fallthru
          _
      $region84: #{tpu_custom_call.1} parent=5 // pred_fallthru
        _
    $region6: #{tpu_custom_call.1} parent=1 // loop_footer
      %s27 = sadd.s32 1, %s23
    $region7: #{tpu_custom_call.1} parent=1 // loop_footer_branch
      %22 = sbr.rel target = $region3
    $region8: #{tpu_custom_call.1} parent=1 // loop_exit
      _
    %980 = vsyncpa [#allocation7], 1
    %s981 = scalar_lea.sflag [#allocation7], 1
    %982 = vsyncpa %s981, 1
    %983 = vsyncpa [#allocation10], 1
    %s984 = scalar_lea.sflag [#allocation10], 1
    %985 = vsyncpa %s984, 1
    %986 = vsyncpa [#allocation13], 1
    %987 = vsyncpa [#allocation8], 1
    %s988 = scalar_lea.sflag [#allocation8], 1
    %989 = vsyncpa %s988, 1

</llo_original>
